<compile_context>
chip_gen: v7x
topology: tpu7x:2x2x1
jax: 0.10.0
libtpu: 0.0.40
codegen_flags: <defaults>
</compile_context>

<pallas_src>
import functools

import jax
import jax.numpy as jnp
from jax.experimental import pallas as pl
from jax.experimental.pallas import tpu as pltpu

_LANES = 128


def _focal_loss_kernel(*refs, alpha, gamma, n_valid, tile_rows, has_pw):
    """One grid step: focal loss over a (tile_rows, 128) slab of the flattened
    [B*C] element stream; writes an (8, 128) lane-dense partial-sum block."""
    if has_pw:
        x_ref, t_ref, pw_ref, out_ref = refs
    else:
        x_ref, t_ref, out_ref = refs

    # Widen to f32 (inputs may arrive as bf16 to halve HBM traffic).
    x = x_ref[...].astype(jnp.float32)
    t = t_ref[...].astype(jnp.float32)

    # Single exp per element; both softplus terms derived from it:
    #   softplus(x)  = max(x,0) + log1p(exp(-|x|))   (= -log(1 - sigmoid(x)))
    #   softplus(-x) = softplus(x) - x               (= -log(sigmoid(x)))
    abs_x = jnp.abs(x)
    e = jnp.exp(-abs_x)
    log1p_e = jnp.log1p(e)
    softplus_pos = jnp.maximum(x, 0.0) + log1p_e
    softplus_neg = softplus_pos - x

    # BCE-with-logits; pos_weight scales only the positive-label term.
    pos_term = t * softplus_neg
    if has_pw:
        pos_term = pw_ref[...].astype(jnp.float32) * pos_term
    bce = pos_term + (1.0 - t) * softplus_pos

    # sigmoid(x) reusing exp(-|x|): 1/(1+e) for x>=0, e/(1+e) otherwise.
    # Approx reciprocal stays on the EUP vrcp path (no Newton steps on the VALU).
    inv_denom = pl.reciprocal(1.0 + e, approx=True)
    probs = jnp.where(x >= 0.0, inv_denom, e * inv_denom)

    # 1 - p_t  where p_t = t*p + (1-t)*(1-p)
    one_minus_pt = t * (1.0 - probs) + (1.0 - t) * probs
    if gamma == 2.0:
        focal_w = one_minus_pt * one_minus_pt  # avoid jnp.power -> log+exp on EUP
    else:
        focal_w = jnp.power(one_minus_pt, gamma)

    alpha_t = t * alpha + (1.0 - t) * (1.0 - alpha)
    focal = alpha_t * focal_w * bce

    # Mask the zero-padded tail (flat index >= n_valid) so it never biases the sum.
    rows = jax.lax.broadcasted_iota(jnp.int32, focal.shape, 0)
    lanes = jax.lax.broadcasted_iota(jnp.int32, focal.shape, 1)
    gidx = (pl.program_id(0) * tile_rows + rows) * _LANES + lanes
    focal = jnp.where(gidx < n_valid, focal, 0.0)

    # Reduce (tile_rows, 128) -> (8, 128) partial sums (tile_rows is a multiple
    # of 8, so this reshape is layout-free); final reduction happens in XLA.
    part = focal.reshape(tile_rows // 8, 8, _LANES).sum(axis=0)
    out_ref[...] = part


def focal_loss(inputs, targets, alpha=0.7, gamma=2.0, pos_weight=None,
               tile_rows=None):
    """Pallas TPU implementation of FocalLoss.forward.

    inputs:  [B, C] logits (f32 or bf16)
    targets: [B, C] binary labels
    pos_weight: optional [C] vector (None -> same as PyTorch default)
    returns: scalar f32 (mean focal loss)
    """
    inputs = jnp.asarray(inputs)
    targets = jnp.asarray(targets)
    assert inputs.ndim == 2 and inputs.shape == targets.shape
    B, C = inputs.shape
    n = B * C

    # Keep bf16 inputs as bf16 (half the DMA bytes); math is f32 in-kernel.
    wire_dtype = jnp.bfloat16 if inputs.dtype == jnp.bfloat16 else jnp.float32

    rows = -(-n // _LANES)
    if tile_rows is None:
        # Big enough tiles to amortize per-step pipeline overhead, small enough
        # (512*128*4B = 256 KiB per input buffer) to double-buffer comfortably
        # even within v7x's 64 MiB VMEM.
        tile_rows = 512 if rows >= 512 else -(-rows // 8) * 8
    assert tile_rows % 8 == 0
    rows_total = -(-rows // tile_rows) * tile_rows
    num_tiles = rows_total // tile_rows
    n_pad = rows_total * _LANES

    def flat_pad(a, dtype):
        a = a.reshape(-1).astype(dtype)
        a = jnp.pad(a, (0, n_pad - n))
        return a.reshape(rows_total, _LANES)

    operands = [flat_pad(inputs, wire_dtype), flat_pad(targets, wire_dtype)]
    in_specs = [
        pl.BlockSpec((tile_rows, _LANES), lambda i: (i, 0)),
        pl.BlockSpec((tile_rows, _LANES), lambda i: (i, 0)),
    ]

    has_pw = pos_weight is not None
    if has_pw:
        pw = jnp.asarray(pos_weight, jnp.float32).reshape(1, C)
        operands.append(flat_pad(jnp.broadcast_to(pw, (B, C)), jnp.float32))
        in_specs.append(pl.BlockSpec((tile_rows, _LANES), lambda i: (i, 0)))

    kernel = functools.partial(
        _focal_loss_kernel,
        alpha=float(alpha),
        gamma=float(gamma),
        n_valid=n,
        tile_rows=tile_rows,
        has_pw=has_pw,
    )

    partials = pl.pallas_call(
        kernel,
        out_shape=jax.ShapeDtypeStruct((8, num_tiles * _LANES), jnp.float32),
        grid=(num_tiles,),
        in_specs=in_specs,
        out_specs=pl.BlockSpec((8, _LANES), lambda i: (0, i)),
        compiler_params=pltpu.CompilerParams(
            dimension_semantics=("parallel",),
            vmem_limit_bytes=32 * 1024 * 1024,
        ),
    )(*operands)

    # Final tiny reduction + mean scaling (divisor is the original B*C).
    return jnp.sum(partials) * (1.0 / float(n))


def _reference_focal_loss(inputs, targets, alpha=0.7, gamma=2.0, pos_weight=None):
    """Pure-JAX reference mirroring the PyTorch module."""
    x = inputs.astype(jnp.float32)
    t = targets.astype(jnp.float32)
    if pos_weight is None:
        pw = jnp.ones((1, x.shape[-1]), jnp.float32)
    else:
        pw = jnp.asarray(pos_weight, jnp.float32).reshape(1, -1)
    probs = jax.nn.sigmoid(x)
    bce = pw * t * jax.nn.softplus(-x) + (1.0 - t) * jax.nn.softplus(x)
    p_t = t * probs + (1.0 - t) * (1.0 - probs)
    focal = (t * alpha + (1.0 - t) * (1.0 - alpha)) * (1.0 - p_t) ** gamma * bce
    return jnp.mean(focal)


if __name__ == "__main__":
    key = jax.random.PRNGKey(0)
    k1, k2, k3, k4 = jax.random.split(key, 4)

    # Small shapes consistent with the module: [batch_size, 5] logits / labels.
    B, C = 8, 5
    logits = jax.random.normal(k1, (B, C), dtype=jnp.float32) * 2.0
    labels = (jax.random.uniform(k2, (B, C)) < 0.3).astype(jnp.float32)

    # 1) Default path (pos_weight=None), single tile.
    loss = jax.block_until_ready(focal_loss(logits, labels, alpha=0.7, gamma=2.0))
    ref = _reference_focal_loss(logits, labels, alpha=0.7, gamma=2.0)
    assert jnp.allclose(loss, ref, rtol=2e-3, atol=1e-5), (loss, ref)

    # 2) Multi-tile grid + pos_weight path + tail masking (forced small tiles).
    B2 = 512
    logits2 = jax.random.normal(k3, (B2, C), dtype=jnp.float32) * 2.0
    labels2 = (jax.random.uniform(k4, (B2, C)) < 0.3).astype(jnp.float32)
    pw = jnp.array([1.0, 2.0, 0.5, 3.0, 1.5], dtype=jnp.float32)
    loss2 = jax.block_until_ready(
        focal_loss(logits2, labels2, alpha=0.7, gamma=2.0, pos_weight=pw, tile_rows=8))
    ref2 = _reference_focal_loss(logits2, labels2, alpha=0.7, gamma=2.0, pos_weight=pw)
    assert jnp.allclose(loss2, ref2, rtol=2e-3, atol=1e-5), (loss2, ref2)

    # 3) bf16 inputs on the wire (f32 math inside); loose tolerance for bf16 quantization.
    loss3 = jax.block_until_ready(
        focal_loss(logits.astype(jnp.bfloat16), labels.astype(jnp.bfloat16)))
    assert jnp.allclose(loss3, ref, rtol=5e-2, atol=1e-3), (loss3, ref)

    print("KERNEL_OK")
</pallas_src>

<mosaic_0001>
module attributes {stable_mosaic.version = 11 : i64} {
  func.func @_focal_loss_kernel(%arg0: i32, %arg1: memref<8x128xf32, #tpu.memory_space<vmem>>, %arg2: memref<8x128xf32, #tpu.memory_space<vmem>>, %arg3: memref<8x128xf32, #tpu.memory_space<vmem>>) attributes {dimension_semantics = [#tpu.dimension_semantics<parallel>], iteration_bounds = array<i64: 1>, scalar_prefetch = 0 : i64, scratch_operands = 0 : i64, tpu.core_type = #tpu.core_type<tc>, window_params = [{transform_indices = @transform_0, window_bounds = array<i64: 8, 128>}, {transform_indices = @transform_1, window_bounds = array<i64: 8, 128>}, {transform_indices = @transform_2, window_bounds = array<i64: 8, 128>}]} {
    %c0 = arith.constant 0 : index
    %c0_0 = arith.constant 0 : index
    %0 = vector.load %arg1[%c0, %c0_0] : memref<8x128xf32, #tpu.memory_space<vmem>>, vector<8x128xf32>
    %c0_1 = arith.constant 0 : index
    %c0_2 = arith.constant 0 : index
    %1 = vector.load %arg2[%c0_1, %c0_2] : memref<8x128xf32, #tpu.memory_space<vmem>>, vector<8x128xf32>
    %2 = math.absf %0 : vector<8x128xf32>
    %cst = arith.constant 0.000000e+00 : f32
    %3 = vector.broadcast %cst : f32 to vector<8x128xf32>
    %4 = arith.subf %3, %2 : vector<8x128xf32>
    %5 = math.exp %4 : vector<8x128xf32>
    %6 = math.log1p %5 : vector<8x128xf32>
    %cst_3 = arith.constant 0.000000e+00 : f32
    %7 = vector.broadcast %cst_3 : f32 to vector<8x128xf32>
    %8 = arith.maximumf %0, %7 : vector<8x128xf32>
    %9 = arith.addf %8, %6 : vector<8x128xf32>
    %10 = arith.subf %9, %0 : vector<8x128xf32>
    %11 = arith.mulf %1, %10 : vector<8x128xf32>
    %cst_4 = arith.constant 1.000000e+00 : f32
    %12 = vector.broadcast %cst_4 : f32 to vector<8x128xf32>
    %13 = arith.subf %12, %1 : vector<8x128xf32>
    %14 = arith.mulf %13, %9 : vector<8x128xf32>
    %15 = arith.addf %11, %14 : vector<8x128xf32>
    %cst_5 = arith.constant 1.000000e+00 : f32
    %16 = vector.broadcast %cst_5 : f32 to vector<8x128xf32>
    %17 = arith.addf %16, %5 : vector<8x128xf32>
    %18 = tpu.reciprocal %17 {approx = true} : vector<8x128xf32> -> vector<8x128xf32>
    %cst_6 = arith.constant 0.000000e+00 : f32
    %19 = vector.broadcast %cst_6 : f32 to vector<8x128xf32>
    %20 = arith.cmpf oge, %0, %19 : vector<8x128xf32>
    %21 = arith.mulf %5, %18 : vector<8x128xf32>
    %22 = arith.select %20, %18, %21 : vector<8x128xi1>, vector<8x128xf32>
    %cst_7 = arith.constant 1.000000e+00 : f32
    %23 = vector.broadcast %cst_7 : f32 to vector<8x128xf32>
    %24 = arith.subf %23, %22 : vector<8x128xf32>
    %25 = arith.mulf %1, %24 : vector<8x128xf32>
    %cst_8 = arith.constant 1.000000e+00 : f32
    %26 = vector.broadcast %cst_8 : f32 to vector<8x128xf32>
    %27 = arith.subf %26, %1 : vector<8x128xf32>
    %28 = arith.mulf %27, %22 : vector<8x128xf32>
    %29 = arith.addf %25, %28 : vector<8x128xf32>
    %30 = arith.mulf %29, %29 : vector<8x128xf32>
    %cst_9 = arith.constant 0.699999988 : f32
    %31 = vector.broadcast %cst_9 : f32 to vector<8x128xf32>
    %32 = arith.mulf %1, %31 : vector<8x128xf32>
    %cst_10 = arith.constant 1.000000e+00 : f32
    %33 = vector.broadcast %cst_10 : f32 to vector<8x128xf32>
    %34 = arith.subf %33, %1 : vector<8x128xf32>
    %cst_11 = arith.constant 3.000000e-01 : f32
    %35 = vector.broadcast %cst_11 : f32 to vector<8x128xf32>
    %36 = arith.mulf %34, %35 : vector<8x128xf32>
    %37 = arith.addf %32, %36 : vector<8x128xf32>
    %38 = arith.mulf %37, %30 : vector<8x128xf32>
    %39 = arith.mulf %38, %15 : vector<8x128xf32>
    %40 = tpu.iota {dimensions = array<i32: 0>} : vector<8x128xi32>
    %41 = tpu.iota {dimensions = array<i32: 1>} : vector<8x128xi32>
    %c8_i32 = arith.constant 8 : i32
    %42 = arith.muli %arg0, %c8_i32 : i32
    %43 = vector.broadcast %42 : i32 to vector<8x128xi32>
    %44 = arith.addi %43, %40 : vector<8x128xi32>
    %c128_i32 = arith.constant 128 : i32
    %45 = vector.broadcast %c128_i32 : i32 to vector<8x128xi32>
    %46 = arith.muli %44, %45 : vector<8x128xi32>
    %47 = arith.addi %46, %41 : vector<8x128xi32>
    %c40_i32 = arith.constant 40 : i32
    %48 = vector.broadcast %c40_i32 : i32 to vector<8x128xi32>
    %49 = arith.cmpi slt, %47, %48 : vector<8x128xi32>
    %cst_12 = arith.constant 0.000000e+00 : f32
    %50 = vector.broadcast %cst_12 : f32 to vector<8x128xf32>
    %51 = arith.select %49, %39, %50 : vector<8x128xi1>, vector<8x128xf32>
    %52 = vector.shape_cast %51 : vector<8x128xf32> to vector<1x8x128xf32>
    %cst_13 = arith.constant dense<0.000000e+00> : vector<8x128xf32>
    %53 = vector.multi_reduction <add>, %52, %cst_13 [0] : vector<1x8x128xf32> to vector<8x128xf32>
    %c0_14 = arith.constant 0 : index
    %c0_15 = arith.constant 0 : index
    %54 = vector.load %arg3[%c0_14, %c0_15] : memref<8x128xf32, #tpu.memory_space<vmem>>, vector<8x128xf32>
    tpu.vector_store %arg3[%c0_14, %c0_15], %53 {strides = array<i32>} : memref<8x128xf32, #tpu.memory_space<vmem>>, vector<8x128xf32>,
    return
  }
  func.func @transform_0(%arg0: i32) -> (i32, i32) {
    %c0_i32 = arith.constant 0 : i32
    %c0_i32_0 = arith.constant 0 : i32
    return %arg0, %c0_i32 : i32, i32
  }
  func.func @transform_1(%arg0: i32) -> (i32, i32) {
    %c0_i32 = arith.constant 0 : i32
    %c0_i32_0 = arith.constant 0 : i32
    return %arg0, %c0_i32 : i32, i32
  }
  func.func @transform_2(%arg0: i32) -> (i32, i32) {
    %c0_i32 = arith.constant 0 : i32
    %c0_i32_0 = arith.constant 0 : i32
    return %c0_i32, %arg0 : i32, i32
  }
}

</mosaic_0001>

<llo_original>
// kernel: tpu_custom_call.1
$region0: #{tpu_custom_call.1}
  #allocation0 [shape = 'u32[]', space=smem, size = 0x4, offset = 0x4, fixed_abs, tag = 'smem constant byte address 0x4 - core index']
  #allocation1 [shape = 'u32[144,128]{1,0:T(1,128)}', space=vmem, size = 0x12000, scoped, tag = 'internal scratch']
  %s0 = inlined_call_operand.hbm [shape: f32[8,128], index: 0, kind: input, shape index: {}]
  %s1 = inlined_call_operand.hbm [shape: f32[8,128], index: 1, kind: input, shape index: {}]
  %s2 = inlined_call_operand.hbm [shape: f32[8,128], index: 2, kind: output, shape index: {}]
  %s3 = sld [smem:[#allocation0]]
  $region26: #{tpu_custom_call.1} parent=0
    _
  %s5 = ssub.s32 1, %s3
  %s6 = scalar_select 0, %s5, %s3
  $region1: #{tpu_custom_call.1} parent=0
    #allocation2 [shape = 'u8[4096]{0}', space=vmem, size = 0x1000, scoped, tag = 'input window, operand 0, single buffered']
    #allocation3 [shape = 's32[1]{0}', space=sflag, size = 0x4, scoped, tag = 'scoped memory for tpu_custom_call.1']
    #allocation4 [shape = 's32[1]{0}', space=sflag, size = 0x4, scoped, tag = 'scoped memory for tpu_custom_call.1']
    #allocation5 [shape = 'u8[4096]{0}', space=vmem, size = 0x1000, scoped, tag = 'input window, operand 1, single buffered']
    #allocation6 [shape = 's32[1]{0}', space=sflag, size = 0x4, scoped, tag = 'scoped memory for tpu_custom_call.1']
    #allocation7 [shape = 'u8[4096]{0}', space=vmem, size = 0x1000, scoped, tag = 'output window, operand 0, single buffered']
    %7 = vsyncpa [#allocation3], 0
    %8 = vsyncpa [#allocation6], 0
    %9 = vsyncpa [#allocation4], 0
    // Predicated region
    $region2: #{tpu_custom_call.1} parent=1 // pred_check
      _
    $region3: #{tpu_custom_call.1} parent=1 // pred_check_branch
      %11 = sbr.rel (0) target = $region5
    $region4: #{tpu_custom_call.1} parent=1 // pred_region
      %s13 = ssub.s32 128, 128
      %14 = vsyncadd [#allocation3], %s13
      %s16 = sshll.u32 [#allocation2], 4
      %s17 = int_to_ptr.vmem [resolvable:$true] %s16
      %19 = dma.hbm_to_vmem [thread:$0]  %s0, 128, %s17, [#allocation3]
    $region5: #{tpu_custom_call.1} parent=1 // pred_fallthru
      _
    // Predicated region
    $region6: #{tpu_custom_call.1} parent=1 // pred_check
      _
    $region7: #{tpu_custom_call.1} parent=1 // pred_check_branch
      %21 = sbr.rel (0) target = $region9
    $region8: #{tpu_custom_call.1} parent=1 // pred_region
      %s23 = ssub.s32 128, 128
      %24 = vsyncadd [#allocation6], %s23
      %s26 = sshll.u32 [#allocation5], 4
      %s27 = int_to_ptr.vmem [resolvable:$true] %s26
      %29 = dma.hbm_to_vmem [thread:$0]  %s1, 128, %s27, [#allocation6]
    $region9: #{tpu_custom_call.1} parent=1 // pred_fallthru
      _
    // Predicated region
    $region10: #{tpu_custom_call.1} parent=1 // pred_check
      _
    $region11: #{tpu_custom_call.1} parent=1 // pred_check_branch
      %31 = sbr.rel (0) target = $region13
    $region12: #{tpu_custom_call.1} parent=1 // pred_region
      %32 = dma.done [#allocation3], 128
    $region13: #{tpu_custom_call.1} parent=1 // pred_fallthru
      _
    // Predicated region
    $region14: #{tpu_custom_call.1} parent=1 // pred_check
      _
    $region15: #{tpu_custom_call.1} parent=1 // pred_check_branch
      %34 = sbr.rel (0) target = $region17
    $region16: #{tpu_custom_call.1} parent=1 // pred_region
      %35 = dma.done [#allocation6], 128
    $region17: #{tpu_custom_call.1} parent=1 // pred_fallthru
      _
    %v36 = vld [vmem:[#allocation2] sm:$0xff]
    %v37 = vld [vmem:[#allocation5] sm:$0xff]
    %v38 = vand.u32 2147483647, %v36
    %v39 = vsub.f32 0.0, %v38
    %v40 = vmul.f32 %v39, 1.442695
    %v41 = vpow.pop %v40
    %v42 = vadd.f32 %v41, 1.0
    %v43 = vlog2.pop %v42
    %v44 = vmul.f32 %v43, 0.6931472
    %v45 = vmul.f32 -0.5, %v41
    %v46 = vadd.f32 %v45, 1.0
    %v47 = vmul.f32 %v46, %v41
    %v48 = vand.u32 2147483647, %v41
    %vm49 = vcmp.lt.f32.partialorder %v48, 0.0004427343
    %v50 = vsel %vm49, %v47, %v44
    %v51 = vmax.f32 %v36, 0.0
    %v52 = vadd.f32 %v51, %v50
    %v53 = vsub.f32 %v52, %v36
    %v54 = vmul.f32 %v37, %v53
    %v55 = vsub.f32 1.0, %v37
    %v56 = vmul.f32 %v55, %v52
    %v57 = vadd.f32 %v54, %v56
    %v58 = vadd.f32 %v41, 1.0
    %v59 = vrcp.pop %v58
    %vm60 = vcmp.ge.f32.partialorder %v36, 0.0
    %v61 = vmul.f32 %v41, %v59
    %v62 = vsel %vm60, %v59, %v61
    %v63 = vsub.f32 1.0, %v62
    %v64 = vmul.f32 %v37, %v63
    %v65 = vmul.f32 %v55, %v62
    %v66 = vadd.f32 %v64, %v65
    %v67 = vmul.f32 %v66, %v66
    %v68 = vmul.f32 %v37, 0.7
    %v69 = vmul.f32 %v55, 0.3
    %v70 = vadd.f32 %v68, %v69
    %v71 = vmul.f32 %v70, %v67
    %v72 = vmul.f32 %v71, %v57
    %v73 = vlaneseq
    %v74 = vshrl.u32 %v73, 7
    %v75 = vlaneseq
    %v76 = vand.u32 %v75, 127
    %s77 = smul.u32 0, 8
    %v78 = vstv %s77
    %v79 = vadd.s32 %v78, %v74
    %v80 = vmul.u32 %v79, 128
    %v81 = vadd.s32 %v80, %v76
    %vm82 = vcmp.lt.s32.totalorder %v81, 40
    %v83 = vsel %vm82, %v72, 0.0
    %v84 = vadd.f32 %v83, 0.0
    %85 = vst [vmem:[#allocation7] sm:$0xff] %v84
    // Predicated region
    $region18: #{tpu_custom_call.1} parent=1 // pred_check
      _
    $region19: #{tpu_custom_call.1} parent=1 // pred_check_branch
      %87 = sbr.rel (0) target = $region21
    $region20: #{tpu_custom_call.1} parent=1 // pred_region
      %s89 = ssub.s32 128, 128
      %90 = vsyncadd [#allocation4], %s89
      %s92 = sshll.u32 [#allocation7], 4
      %s93 = int_to_ptr.vmem [resolvable:$true] %s92
      %95 = dma.vmem_to_hbm [thread:$0]  %s93, 128, %s2, [#allocation4]
    $region21: #{tpu_custom_call.1} parent=1 // pred_fallthru
      _
    // Predicated region
    $region22: #{tpu_custom_call.1} parent=1 // pred_check
      _
    $region23: #{tpu_custom_call.1} parent=1 // pred_check_branch
      %97 = sbr.rel (0) target = $region25
    $region24: #{tpu_custom_call.1} parent=1 // pred_region
      %98 = dma.done [#allocation4], 128
    $region25: #{tpu_custom_call.1} parent=1 // pred_fallthru
      _
    %99 = vsyncpa [#allocation3], 1
    %100 = vsyncpa [#allocation6], 1
    %101 = vsyncpa [#allocation4], 1

</llo_original>
